<compile_context>
chip_gen: v5e
topology: v5e:2x2
jax: 0.10.0
libtpu: 0.0.40
codegen_flags: <defaults>
</compile_context>

<pallas_src>
import numpy as np
import jax
import jax.numpy as jnp
from jax.experimental import pallas as pl
from jax.experimental.pallas import tpu as pltpu


def _round_up(x: int, m: int) -> int:
    return ((x + m - 1) // m) * m


# ----------------------------- Pallas kernel ---------------------------------

def _make_gather_kernel(n_tables: int, rows: int, num_ent: int):
    """Kernel gathering `rows` rows per grid step from `n_tables` HBM tables.

    Ref layout (after the scalar-prefetch idx ref):
      refs[0:n]        -> HBM table refs        (num_ent, es)   memory_space=ANY
      refs[n:2n]       -> output block refs     (rows,   es)    VMEM
      refs[2n:3n]      -> VMEM scratch buffers  (rows,   es)
      refs[3n]         -> DMA semaphores        (n, rows)
    """

    def kernel(idx_ref, *refs):
        tables = refs[:n_tables]
        outs = refs[n_tables:2 * n_tables]
        bufs = refs[2 * n_tables:3 * n_tables]
        sem = refs[3 * n_tables]

        base = pl.program_id(0) * rows

        # Issue all R (x n_tables) row DMAs so HBM latency overlaps across rows.
        @pl.loop(0, rows)
        def _issue(r):
            row = idx_ref[base + r]
            # Clamp defensively: an out-of-range index would drive an OOB HBM DMA.
            row = jnp.minimum(jnp.maximum(row, 0), num_ent - 1)
            for t in range(n_tables):
                pltpu.make_async_copy(
                    tables[t].at[pl.ds(row, 1), :],
                    bufs[t].at[pl.ds(r, 1), :],
                    sem.at[t, r],
                ).start()

        # Wait for all of them.
        @pl.loop(0, rows)
        def _wait(r):
            for t in range(n_tables):
                pltpu.make_async_copy(
                    tables[t].at[pl.ds(0, 1), :],   # shape-only src for the wait
                    bufs[t].at[pl.ds(r, 1), :],
                    sem.at[t, r],
                ).wait()

        # Land the whole sublane/lane-dense tile into the pipelined output block.
        for t in range(n_tables):
            outs[t][...] = bufs[t][...]

    return kernel


def embedding_gather(tables, idx_flat: jax.Array, rows_per_step: int = 128):
    """Gather rows `table[idx_flat]` from one or more embedding tables in a single
    Pallas TPU kernel.

    tables:   tuple of (num_ent, es) float arrays (all the same shape)
    idx_flat: (num_idx,) integer indices
    returns:  tuple of (num_idx, es) arrays, one per table
    """
    tables = tuple(tables)
    n = len(tables)
    num_ent, es = tables[0].shape
    for t in tables:
        assert t.shape == (num_ent, es), (t.shape, (num_ent, es))

    idx_flat = idx_flat.astype(jnp.int32)
    num_idx = idx_flat.shape[0]

    # Rows per grid step: multiple of 8 (sublane-dense output block), capped at 128.
    rows = int(min(rows_per_step, _round_up(num_idx, 8)))
    num_padded = _round_up(num_idx, rows)
    if num_padded != num_idx:
        idx_flat = jnp.pad(idx_flat, (0, num_padded - num_idx))  # padded slots gather row 0

    grid = (num_padded // rows,)
    kernel = _make_gather_kernel(n, rows, num_ent)

    out_index_map = lambda i, idx_ref: (i, 0)
    if n == 1:
        out_shape = jax.ShapeDtypeStruct((num_padded, es), tables[0].dtype)
        out_specs = pl.BlockSpec((rows, es), out_index_map)
    else:
        out_shape = tuple(jax.ShapeDtypeStruct((num_padded, es), t.dtype) for t in tables)
        out_specs = tuple(pl.BlockSpec((rows, es), out_index_map) for _ in tables)

    result = pl.pallas_call(
        kernel,
        out_shape=out_shape,
        grid_spec=pltpu.PrefetchScalarGridSpec(
            num_scalar_prefetch=1,                         # idx_flat lives in SMEM
            grid=grid,
            in_specs=[pl.BlockSpec(memory_space=pl.ANY) for _ in tables],  # tables stay in HBM
            out_specs=out_specs,
            scratch_shapes=[pltpu.VMEM((rows, es), t.dtype) for t in tables]
                         + [pltpu.SemaphoreType.DMA((n, rows))],
        ),
        compiler_params=pltpu.CompilerParams(
            dimension_semantics=("parallel",),             # independent index chunks (v7x 2-TC)
        ),
    )(idx_flat, *tables)

    outs = (result,) if n == 1 else tuple(result)
    if num_padded != num_idx:
        outs = tuple(o[:num_idx] for o in outs)
    return outs


# ----------------------------- Module wrapper ---------------------------------

class EmbeddingPallas:
    """JAX/Pallas port of the PyTorch `Embedding` module's forward pass."""

    def __init__(self, dataset, parameter, key):
        self.ent2id = dataset["ent2id"]
        self.es = parameter["embed_dim"]
        self.rum = parameter["rum"]
        num_ent = len(self.ent2id)

        self.rum_weight = None
        if parameter["data_form"] in ("Pre-Train", "In-Train"):
            w = jnp.asarray(dataset["ent2emb"], dtype=jnp.float32)
            assert w.shape == (num_ent, self.es)
            self.weight = w
            if self.rum is True:
                # rum table is a (frozen) copy of the pretrained embeddings.
                # Keep it as the SAME array so the forward can deduplicate the gather.
                self.rum_weight = w
        elif parameter["data_form"] in ("Discard",):
            # xavier_uniform_ equivalent (deterministic via the provided key)
            limit = float(np.sqrt(6.0 / (num_ent + self.es)))
            self.weight = jax.random.uniform(
                key, (num_ent, self.es), dtype=jnp.float32, minval=-limit, maxval=limit
            )
        else:
            raise ValueError("unknown data_form")

    def __call__(self, triples):
        # Host-side index construction (string -> id lookup), mirroring the PyTorch loop.
        pair_num = len(max(triples, key=len))
        idx_ = np.zeros((len(triples), pair_num, 2), dtype=np.int32)
        for i in range(len(triples)):
            for j in range(len(triples[i])):
                idx_[i][j][0] = self.ent2id[triples[i][j][0]]
                idx_[i][j][1] = self.ent2id[triples[i][j][2]]
        idx = jnp.asarray(idx_)                       # (B, P, 2) int32
        B, P, _ = idx.shape
        idx_flat = idx.reshape(-1)                    # (B*P*2,)

        if self.rum_weight is None:
            # torch: self.embedding(idx).unsqueeze(2)  -> (B, P, 1, 2, es)
            (emb,) = embedding_gather((self.weight,), idx_flat)
            return emb.reshape(B, P, 2, self.es)[:, :, None, :, :]

        if self.rum_weight is self.weight:
            # Pre-Train/In-Train + rum: both tables are identical -> single gather, stack twice.
            (emb,) = embedding_gather((self.weight,), idx_flat)
            emb = emb.reshape(B, P, 2, self.es)
            return jnp.stack((emb, emb), axis=2)      # (B, P, 2, 2, es)

        # Distinct tables: fused two-table gather in ONE kernel (shared index prefetch/DMAs).
        rum, emb = embedding_gather((self.rum_weight, self.weight), idx_flat)
        rum = rum.reshape(B, P, 2, self.es)
        emb = emb.reshape(B, P, 2, self.es)
        # torch: torch.stack((rum_embedding(idx), embedding(idx)), dim=2) -> (B, P, 2, 2, es)
        return jnp.stack((rum, emb), axis=2)


# ----------------------------------- main --------------------------------------

if __name__ == "__main__":
    key = jax.random.PRNGKey(0)
    k_emb, k_xav = jax.random.split(key)

    # Small synthetic "dataset"
    num_ent = 32
    es = 128
    ent_names = [f"e{i}" for i in range(num_ent)]
    ent2id = {name: i for i, name in enumerate(ent_names)}
    ent2emb = np.asarray(jax.random.normal(k_emb, (num_ent, es), dtype=jnp.float32))

    dataset = {"ent2id": ent2id, "ent2emb": ent2emb}
    parameter = {
        "device": None,
        "embed_dim": es,
        "rum": True,
        "data_form": "Pre-Train",
        "fine_tune": False,
    }

    # triples: list (batch) of lists of (head, rel, tail) string triples, ragged lengths
    triples = [
        [("e1", "r0", "e5"), ("e2", "r1", "e7"), ("e3", "r0", "e9"), ("e4", "r2", "e11")],
        [("e10", "r1", "e20"), ("e12", "r2", "e22"), ("e14", "r0", "e24")],
    ]

    def build_idx(trps, e2i):
        b = len(trps)
        p = len(max(trps, key=len))
        out = np.zeros((b, p, 2), dtype=np.int32)
        for i in range(b):
            for j in range(len(trps[i])):
                out[i][j][0] = e2i[trps[i][j][0]]
                out[i][j][1] = e2i[trps[i][j][2]]
        return out

    idx_j = jnp.asarray(build_idx(triples, ent2id))
    B, P, _ = idx_j.shape

    # --- Test 1: rum=True Pre-Train (dedup path, single gather) -> (B, P, 2, 2, es) ---
    model = EmbeddingPallas(dataset, parameter, k_xav)
    out = jax.block_until_ready(model(triples))
    ref_emb = jnp.take(model.weight, idx_j.reshape(-1), axis=0).reshape(B, P, 2, es)
    ref_rum = jnp.take(model.rum_weight, idx_j.reshape(-1), axis=0).reshape(B, P, 2, es)
    ref = jnp.stack((ref_rum, ref_emb), axis=2)
    assert out.shape == (B, P, 2, 2, es), out.shape
    np.testing.assert_allclose(np.asarray(out), np.asarray(ref), rtol=0, atol=0)

    # --- Test 2: rum=False -> (B, P, 1, 2, es) ---
    model2 = EmbeddingPallas(dataset, dict(parameter, rum=False), k_xav)
    out2 = jax.block_until_ready(model2(triples))
    ref2 = ref_emb[:, :, None, :, :]
    assert out2.shape == (B, P, 1, 2, es), out2.shape
    np.testing.assert_allclose(np.asarray(out2), np.asarray(ref2), rtol=0, atol=0)

    # --- Test 3: distinct rum table -> fused two-table gather in a single kernel ---
    model3 = EmbeddingPallas(dataset, parameter, k_xav)
    model3.rum_weight = model3.weight * 0.5 + 1.0     # force the fused (2-table) path
    out3 = jax.block_until_ready(model3(triples))
    ref_rum3 = jnp.take(model3.rum_weight, idx_j.reshape(-1), axis=0).reshape(B, P, 2, es)
    ref3 = jnp.stack((ref_rum3, ref_emb), axis=2)
    assert out3.shape == (B, P, 2, 2, es), out3.shape
    np.testing.assert_allclose(np.asarray(out3), np.asarray(ref3), rtol=0, atol=0)

    # --- Test 4: larger ragged batch -> multi-step grid + tail padding path ---
    rng = np.random.default_rng(0)
    lens = [37, 50]
    triples_big = [
        [(f"e{int(rng.integers(num_ent))}", "r0", f"e{int(rng.integers(num_ent))}")
         for _ in range(L)]
        for L in lens
    ]
    out4 = jax.block_until_ready(model(triples_big))
    idx_big = jnp.asarray(build_idx(triples_big, ent2id))
    Bb, Pb, _ = idx_big.shape
    ref_emb_b = jnp.take(model.weight, idx_big.reshape(-1), axis=0).reshape(Bb, Pb, 2, es)
    ref4 = jnp.stack((ref_emb_b, ref_emb_b), axis=2)
    assert out4.shape == (Bb, Pb, 2, 2, es), out4.shape
    np.testing.assert_allclose(np.asarray(out4), np.asarray(ref4), rtol=0, atol=0)

    print("KERNEL_OK")
</pallas_src>

<mosaic_0001>
module attributes {stable_mosaic.version = 11 : i64} {
  func.func @kernel(%arg0: i32, %arg1: memref<16xi32, #tpu.memory_space<smem>>, %arg2: memref<32x128xf32, #tpu.memory_space<any>>, %arg3: memref<16x128xf32, #tpu.memory_space<vmem>>, %arg4: memref<16x128xf32, #tpu.memory_space<vmem>>, %arg5: memref<1x16x!tpu.dma_semaphore, #tpu.memory_space<semaphore_mem>>) attributes {dimension_semantics = [#tpu.dimension_semantics<parallel>], iteration_bounds = array<i64: 1>, scalar_prefetch = 1 : i64, scratch_operands = 2 : i64, tpu.core_type = #tpu.core_type<tc>, window_params = [{}, {transform_indices = @transform_1, window_bounds = array<i64: 16, 128>}]} {
    %c16_i32 = arith.constant 16 : i32
    %0 = arith.muli %arg0, %c16_i32 : i32
    %c0_i32 = arith.constant 0 : i32
    %c16_i32_0 = arith.constant 16 : i32
    %1 = arith.addi %c0_i32, %c16_i32_0 : i32
    %c1_i32 = arith.constant 1 : i32
    scf.for %arg6 = %c0_i32 to %1 step %c1_i32  : i32 {
      %c1_i32_9 = arith.constant 1 : i32
      %5 = arith.muli %arg6, %c1_i32_9 : i32
      %c0_i32_10 = arith.constant 0 : i32
      %6 = arith.addi %c0_i32_10, %5 : i32
      %7 = arith.addi %0, %6 : i32
      %8 = arith.index_cast %7 : i32 to index
      %9 = memref.load %arg1[%8] : memref<16xi32, #tpu.memory_space<smem>>
      %c0_i32_11 = arith.constant 0 : i32
      %10 = arith.maxsi %9, %c0_i32_11 : i32
      %c31_i32 = arith.constant 31 : i32
      %11 = arith.minsi %10, %c31_i32 : i32
      %c0_i32_12 = arith.constant 0 : i32
      %c0_i32_13 = arith.constant 0 : i32
      %12 = tpu.memref_slice %arg2[%11, %c0_i32_13] : memref<32x128xf32, #tpu.memory_space<any>> -> memref<1x128xf32, #tpu.memory_space<any>>
      %c0_i32_14 = arith.constant 0 : i32
      %13 = tpu.memref_slice %arg4[%6, %c0_i32_14] : memref<16x128xf32, #tpu.memory_space<vmem>> -> memref<1x128xf32, #tpu.memory_space<vmem>>
      %14 = tpu.memref_slice %arg5[%c0_i32_12, %6] : memref<1x16x!tpu.dma_semaphore, #tpu.memory_space<semaphore_mem>> -> memref<1x1x!tpu.dma_semaphore, #tpu.memory_space<semaphore_mem>>
      %15 = tpu.memref_squeeze %14 : memref<1x1x!tpu.dma_semaphore, #tpu.memory_space<semaphore_mem>> -> memref<!tpu.dma_semaphore, #tpu.memory_space<semaphore_mem>>
      tpu.enqueue_dma source(%12 : memref<1x128xf32, #tpu.memory_space<any>>) target(%13 : memref<1x128xf32, #tpu.memory_space<vmem>>) target_semaphore(%15 : memref<!tpu.dma_semaphore, #tpu.memory_space<semaphore_mem>>)
    }
    %c16_i32_1 = arith.constant 16 : i32
    %c0_i32_2 = arith.constant 0 : i32
    %c16_i32_3 = arith.constant 16 : i32
    %2 = arith.addi %c0_i32_2, %c16_i32_3 : i32
    %c1_i32_4 = arith.constant 1 : i32
    scf.for %arg6 = %c0_i32_2 to %2 step %c1_i32_4  : i32 {
      %c1_i32_9 = arith.constant 1 : i32
      %5 = arith.muli %arg6, %c1_i32_9 : i32
      %c0_i32_10 = arith.constant 0 : i32
      %6 = arith.addi %c0_i32_10, %5 : i32
      %c0_i32_11 = arith.constant 0 : i32
      %c0_i32_12 = arith.constant 0 : i32
      %c0_i32_13 = arith.constant 0 : i32
      %7 = tpu.memref_slice %arg2[%c0_i32_12, %c0_i32_13] : memref<32x128xf32, #tpu.memory_space<any>> -> memref<1x128xf32, #tpu.memory_space<any>>
      %c0_i32_14 = arith.constant 0 : i32
      %8 = tpu.memref_slice %arg4[%6, %c0_i32_14] : memref<16x128xf32, #tpu.memory_space<vmem>> -> memref<1x128xf32, #tpu.memory_space<vmem>>
      %9 = tpu.memref_slice %arg5[%c0_i32_11, %6] : memref<1x16x!tpu.dma_semaphore, #tpu.memory_space<semaphore_mem>> -> memref<1x1x!tpu.dma_semaphore, #tpu.memory_space<semaphore_mem>>
      %10 = tpu.memref_squeeze %9 : memref<1x1x!tpu.dma_semaphore, #tpu.memory_space<semaphore_mem>> -> memref<!tpu.dma_semaphore, #tpu.memory_space<semaphore_mem>>
      tpu.wait_dma2 semaphore(%10 : memref<!tpu.dma_semaphore, #tpu.memory_space<semaphore_mem>>) src(%7 : memref<1x128xf32, #tpu.memory_space<any>>) dst(%8 : memref<1x128xf32, #tpu.memory_space<vmem>>)
    }
    %c16_i32_5 = arith.constant 16 : i32
    %c0 = arith.constant 0 : index
    %c0_6 = arith.constant 0 : index
    %3 = vector.load %arg4[%c0, %c0_6] : memref<16x128xf32, #tpu.memory_space<vmem>>, vector<16x128xf32>
    %c0_7 = arith.constant 0 : index
    %c0_8 = arith.constant 0 : index
    %4 = vector.load %arg3[%c0_7, %c0_8] : memref<16x128xf32, #tpu.memory_space<vmem>>, vector<16x128xf32>
    tpu.vector_store %arg3[%c0_7, %c0_8], %3 {strides = array<i32>} : memref<16x128xf32, #tpu.memory_space<vmem>>, vector<16x128xf32>,
    return
  }
  func.func @transform_1(%arg0: i32, %arg1: memref<16xi32, #tpu.memory_space<smem>>) -> (i32, i32) {
    %c0_i32 = arith.constant 0 : i32
    %c0_i32_0 = arith.constant 0 : i32
    return %arg0, %c0_i32 : i32, i32
  }
}

</mosaic_0001>

<llo_original>
// kernel: tpu_custom_call.1
$region0: #{tpu_custom_call.1}
  #allocation0 [shape = 'u32[]', space=smem, size = 0x4, offset = 0x4, fixed_abs, tag = 'smem constant byte address 0x4 - core index']
  #allocation1 [shape = 'u32[72,128]{1,0:T(1,128)}', space=vmem, size = 0x9000, scoped, tag = 'internal scratch']
  #allocation2 [shape = 'f32[16,128]{1,0:T(8,128)}', space=vmem, size = 0x2000, scoped, tag = 'scratch operand']
  #allocation3 [shape = 's32[16]{0}', space=sflag, size = 0x40, scoped, tag = 'scratch operand']
  #allocation4 [shape = 's32[1]{0}', space=sflag, size = 0x4, scoped, tag = 'scoped memory for tpu_custom_call.1']
  #allocation5 [shape = 'u8[512]{0}', space=smem, size = 0x200, scoped, tag = 'prefetched SMEM operand 0']
  #allocation8 [shape = 's32[]', space=sflag, size = 0x4, offset = 0, fixed_abs, tag = 'sflag constant byte address 0x0 - dummy sync flag']
  #allocation9 [shape = 's32[]', space=sflag, size = 0x4, offset = 0, fixed_abs, tag = 'sflag constant byte address 0x0 - dummy sync flag']
  #allocation10 [shape = 'u32[]', space=smem, size = 0x4, offset = 0x44, fixed_abs, tag = 'smem constant byte address 0x44 - assertion arg 0']
  #allocation11 [shape = 'u32[]', space=smem, size = 0x4, offset = 0x48, fixed_abs, tag = 'smem constant byte address 0x48 - assertion arg 1']
  %s0 = inlined_call_operand.hbm [shape: s32[16], index: 0, kind: input, shape index: {}]
  %s1 = inlined_call_operand.hbm [shape: f32[32,128], index: 1, kind: input, shape index: {}]
  %s2 = inlined_call_operand.hbm [shape: f32[16,128], index: 2, kind: output, shape index: {}]
  %s3 = sld [smem:[#allocation0]]
  $region28: #{tpu_custom_call.1} parent=0
    _
  %s5 = ssub.s32 1, %s3
  %s6 = scalar_select 0, %s5, %s3
  %s8 = sshll.u32 %s0, 4
  %s9 = int_to_ptr.hbm [resolvable:$true] %s8
  %11 = dma.hbm_to_smem %s9, 16, [#allocation5], [#allocation4]
  %13 = dma.done [#allocation4], 16
  %14 = sfence
  $region1: #{tpu_custom_call.1} parent=0
    #allocation6 [shape = 'u8[8192]{0}', space=vmem, size = 0x2000, scoped, tag = 'output window, operand 0, single buffered']
    #allocation7 [shape = 's32[1]{0}', space=sflag, size = 0x4, scoped, tag = 'scoped memory for tpu_custom_call.1']
    %15 = vsyncpa [#allocation7], 0
    %s16 = smul.u32 0, 16
    loop: start=0, step=1, limit=16
    $region2: #{tpu_custom_call.1} parent=1 // loop_pre_header
      _
    $region3: #{tpu_custom_call.1} parent=1 // loop_header
      %s18 = sphi 0, %s22
      %p19 = scmp.ge.s32.totalorder %s18, 16
    $region4: #{tpu_custom_call.1} parent=1 // loop_header_branch
      %21 = sbr.rel (%p19) target = $region8
    $region5: #{tpu_custom_call.1} parent=1 // loop_body
      %s23 = sadd.s32 %s16, %s18
      %s24 = sld [smem:[#allocation5 + %s23]]
      %p25 = scmp.gt.s32.totalorder %s24, 0
      %s26 = scalar_select %p25, %s24, 0
      %p27 = scmp.lt.s32.totalorder %s26, 31
      %s28 = scalar_select %p27, %s26, 31
      %s29 = scalar_lea.hbm %s1, %s28
      %s30 = scalar_lea.vmem [#allocation2], %s18
      %s31 = scalar_lea.sflag [#allocation3], %s18
      // Predicated region
      $region9: #{tpu_custom_call.1} parent=5 // pred_check
        _
      $region10: #{tpu_custom_call.1} parent=5 // pred_check_branch
        %33 = sbr.rel target = $region12
      $region11: #{tpu_custom_call.1} parent=5 // pred_region
        %34 = sst [smem:[#allocation10]] [#allocation9]
        %35 = sst [smem:[#allocation11]] [#allocation8]
      $region12: #{tpu_custom_call.1} parent=5 // pred_fallthru
        _
      %37 = shalt.err (0)
      %s39 = sshll.u32 %s29, 4
      %s40 = int_to_ptr.hbm [resolvable:$true] %s39
      %s41 = sshll.u32 %s30, 4
      %s42 = int_to_ptr.vmem [resolvable:$true] %s41
      %44 = dma.hbm_to_vmem [thread:$0]  %s40, 16, %s42, %s31
    $region6: #{tpu_custom_call.1} parent=1 // loop_footer
      %s22 = sadd.s32 1, %s18
    $region7: #{tpu_custom_call.1} parent=1 // loop_footer_branch
      %17 = sbr.rel target = $region3
    $region8: #{tpu_custom_call.1} parent=1 // loop_exit
      _
    loop: start=0, step=1, limit=16
    $region13: #{tpu_custom_call.1} parent=1 // loop_pre_header
      _
    $region14: #{tpu_custom_call.1} parent=1 // loop_header
      %s46 = sphi 0, %s50
      %p47 = scmp.ge.s32.totalorder %s46, 16
    $region15: #{tpu_custom_call.1} parent=1 // loop_header_branch
      %49 = sbr.rel (%p47) target = $region19
    $region16: #{tpu_custom_call.1} parent=1 // loop_body
      %s51 = scalar_lea.sflag [#allocation3], %s46
      %s52 = smul.u32 1, 1
      %s53 = sshll.u32 %s52, 4
      %54 = dma.done %s51, %s53
    $region17: #{tpu_custom_call.1} parent=1 // loop_footer
      %s50 = sadd.s32 1, %s46
    $region18: #{tpu_custom_call.1} parent=1 // loop_footer_branch
      %45 = sbr.rel target = $region14
    $region19: #{tpu_custom_call.1} parent=1 // loop_exit
      _
    %v55 = vld [vmem:[#allocation2] sm:$0xff]
    %v56 = vld [vmem:[#allocation2 + $0x8] sm:$0xff]
    %57 = vst [vmem:[#allocation6] sm:$0xff] %v55
    %58 = vst [vmem:[#allocation6 + $0x8] sm:$0xff] %v56
    // Predicated region
    $region20: #{tpu_custom_call.1} parent=1 // pred_check
      _
    $region21: #{tpu_custom_call.1} parent=1 // pred_check_branch
      %60 = sbr.rel (0) target = $region23
    $region22: #{tpu_custom_call.1} parent=1 // pred_region
      %62 = vsyncadd [#allocation7], 0
      %s63 = sshll.u32 [#allocation6], 4
      %s64 = int_to_ptr.vmem [resolvable:$true] %s63
      %s65 = sshll.u32 %s2, 4
      %s66 = int_to_ptr.hbm [resolvable:$true] %s65
      %71 = dma.vmem_to_hbm [thread:$0]  %s64, 256, %s66, [#allocation7], 128, 128, 8
    $region23: #{tpu_custom_call.1} parent=1 // pred_fallthru
      _
    // Predicated region
    $region24: #{tpu_custom_call.1} parent=1 // pred_check
      _
    $region25: #{tpu_custom_call.1} parent=1 // pred_check_branch
      %73 = sbr.rel (0) target = $region27
    $region26: #{tpu_custom_call.1} parent=1 // pred_region
      %75 = dma.done [#allocation7], 256
    $region27: #{tpu_custom_call.1} parent=1 // pred_fallthru
      _
    %76 = vsyncpa [#allocation7], 1
  %77 = vsyncmov [#allocation3]
  %s78 = vpop.sfrf %77
  %p79 = scmp.eq.s32.totalorder %s78, 0
  %p80 = pneg %p79
  %82 = shalt.err (%p80)
  %s83 = scalar_lea.sflag [#allocation3], 1
  %84 = vsyncmov %s83
  %s85 = vpop.sfrf %84
  %p86 = scmp.eq.s32.totalorder %s85, 0
  %p87 = pneg %p86
  %89 = shalt.err (%p87)
  %s90 = scalar_lea.sflag [#allocation3], 2
  %91 = vsyncmov %s90
  %s92 = vpop.sfrf %91
  %p93 = scmp.eq.s32.totalorder %s92, 0
  %p94 = pneg %p93
  %96 = shalt.err (%p94)
  %s97 = scalar_lea.sflag [#allocation3], 3
  %98 = vsyncmov %s97
  %s99 = vpop.sfrf %98
  %p100 = scmp.eq.s32.totalorder %s99, 0
  %p101 = pneg %p100
  %103 = shalt.err (%p101)
  %s104 = scalar_lea.sflag [#allocation3], 4
  %105 = vsyncmov %s104
  %s106 = vpop.sfrf %105
  %p107 = scmp.eq.s32.totalorder %s106, 0
  %p108 = pneg %p107
  %110 = shalt.err (%p108)
  %s111 = scalar_lea.sflag [#allocation3], 5
  %112 = vsyncmov %s111
  %s113 = vpop.sfrf %112
  %p114 = scmp.eq.s32.totalorder %s113, 0
  %p115 = pneg %p114
  %117 = shalt.err (%p115)
  %s118 = scalar_lea.sflag [#allocation3], 6
  %119 = vsyncmov %s118
  %s120 = vpop.sfrf %119
  %p121 = scmp.eq.s32.totalorder %s120, 0
  %p122 = pneg %p121
  %124 = shalt.err (%p122)
  %s125 = scalar_lea.sflag [#allocation3], 7
  %126 = vsyncmov %s125
  %s127 = vpop.sfrf %126
  %p128 = scmp.eq.s32.totalorder %s127, 0
  %p129 = pneg %p128
  %131 = shalt.err (%p129)
  %s132 = scalar_lea.sflag [#allocation3], 8
  %133 = vsyncmov %s132
  %s134 = vpop.sfrf %133
  %p135 = scmp.eq.s32.totalorder %s134, 0
  %p136 = pneg %p135
  %138 = shalt.err (%p136)
  %s139 = scalar_lea.sflag [#allocation3], 9
  %140 = vsyncmov %s139
  %s141 = vpop.sfrf %140
  %p142 = scmp.eq.s32.totalorder %s141, 0
  %p143 = pneg %p142
  %145 = shalt.err (%p143)
  %s146 = scalar_lea.sflag [#allocation3], 10
  %147 = vsyncmov %s146
  %s148 = vpop.sfrf %147
  %p149 = scmp.eq.s32.totalorder %s148, 0
  %p150 = pneg %p149
  %152 = shalt.err (%p150)
  %s153 = scalar_lea.sflag [#allocation3], 11
  %154 = vsyncmov %s153
  %s155 = vpop.sfrf %154
  %p156 = scmp.eq.s32.totalorder %s155, 0
  %p157 = pneg %p156
  %159 = shalt.err (%p157)
  %s160 = scalar_lea.sflag [#allocation3], 12
  %161 = vsyncmov %s160
  %s162 = vpop.sfrf %161
  %p163 = scmp.eq.s32.totalorder %s162, 0
  %p164 = pneg %p163
  %166 = shalt.err (%p164)
  %s167 = scalar_lea.sflag [#allocation3], 13
  %168 = vsyncmov %s167
  %s169 = vpop.sfrf %168
  %p170 = scmp.eq.s32.totalorder %s169, 0
  %p171 = pneg %p170
  %173 = shalt.err (%p171)
  %s174 = scalar_lea.sflag [#allocation3], 14
  %175 = vsyncmov %s174
  %s176 = vpop.sfrf %175
  %p177 = scmp.eq.s32.totalorder %s176, 0
  %p178 = pneg %p177
  %180 = shalt.err (%p178)
  %s181 = scalar_lea.sflag [#allocation3], 15
  %182 = vsyncmov %s181
  %s183 = vpop.sfrf %182
  %p184 = scmp.eq.s32.totalorder %s183, 0
  %p185 = pneg %p184
  %187 = shalt.err (%p185)

</llo_original>
